<compile_context>
chip_gen: v6e
topology: v6e:2x2x1
jax: 0.10.0
libtpu: 0.0.40
codegen_flags: <defaults>
</compile_context>

<pallas_src>
import jax
import jax.numpy as jnp
from jax import lax
from jax.experimental import pallas as pl
from jax.experimental.pallas import tpu as pltpu


_LANE = 128
_VMEM_TILE_BUDGET = 40 * 1024 * 1024   # per-tile working-set target (fits v7x 64 MiB)
_VMEM_LIMIT_BYTES = 48 * 1024 * 1024   # scoped limit: > 16/32 MiB defaults, < 64 MiB v7x


def _round_up(x, m):
    return ((x + m - 1) // m) * m


def _landmark_head_kernel(x_ref, w_ref, b_ref, o_ref):
    # x_ref: (C_in, thw)   channel-major activation slab (fused NCHW read)
    # w_ref: (C_in, C_out) full 1x1-conv weight, VMEM-resident across the grid
    # b_ref: (1, C_out)    bias, f32
    # o_ref: (thw, C_out)  output tile in NHWC row order
    x = x_ref[...].astype(w_ref.dtype)      # in-VMEM cast; no extra HBM cast pass
    acc = lax.dot_general(
        x, w_ref[...],
        # contract the channel dim: (K, M) x (K, N) -> (M, N).  If a bundle
        # dump on v7x ever shows a per-tile vxpose of the slab becoming the
        # critical slot, restructure per review; hidden under DMA elsewhere.
        dimension_numbers=(((0,), (0,)), ((), ())),
        preferred_element_type=jnp.float32,
    )
    o_ref[...] = (acc + b_ref[...]).astype(o_ref.dtype)


def landmark_head_forward(x_nchw, weight_oi, bias_o, *, num_anchors=3,
                          thw=8192, compute_dtype=jnp.bfloat16,
                          out_dtype=jnp.float32):
    """x_nchw: (N, C_in, H, W); weight_oi: (C_out, C_in); bias_o: (C_out,).

    Returns (N, H*W*num_anchors, 10), matching the PyTorch module.
    compute_dtype=None keeps the matmul in x's native dtype (f32 parity mode).
    """
    N, C_in, H, W = x_nchw.shape
    C_out = weight_oi.shape[0]
    assert C_out == num_anchors * 10
    HW = H * W

    cdt = jnp.dtype(compute_dtype) if compute_dtype is not None else jnp.dtype(x_nchw.dtype)

    # (N, C_in, H*W) channel-major view; reshape is a free view, the NCHW->NHWC
    # transpose happens inside the kernel (each tile writes NHWC rows directly).
    x3 = x_nchw.reshape(N, C_in, HW)

    w_kn = jnp.transpose(weight_oi, (1, 0)).astype(cdt)   # (C_in, C_out), tiny
    b_2d = bias_o.reshape(1, C_out).astype(jnp.float32)

    x_item = jnp.dtype(x3.dtype).itemsize
    out_item = jnp.dtype(out_dtype).itemsize

    # --- spatial tile sizing -------------------------------------------------
    thw = max(1, min(int(thw), HW))
    # VMEM budget: double-buffered x block + double-buffered output block
    # (the C_out=30 output pads to 128 lanes in VMEM).
    per_row = 2 * (C_in * x_item + _LANE * out_item)
    thw_vmem_max = max(_LANE,
                       ((_VMEM_TILE_BUDGET - (1 << 20)) // per_row) // _LANE * _LANE)
    thw = min(thw, thw_vmem_max)
    # Keep >= 2 parallel grid steps so dual-TensorCore chips (v7x) use both cores.
    if N * pl.cdiv(HW, thw) < 2 and HW > _LANE:
        thw = min(thw, _round_up(pl.cdiv(HW, 2), _LANE))
    # Lane alignment: block last dim must be a multiple of 128 unless it spans HW.
    if thw < HW:
        thw = max(_LANE, (thw // _LANE) * _LANE)
    n_s = pl.cdiv(HW, thw)   # ragged last block handled by Pallas (no jnp.pad pass)

    cost = pl.CostEstimate(
        flops=2 * N * HW * C_in * C_out,
        transcendentals=0,
        bytes_accessed=(N * HW * C_in * x_item
                        + C_in * C_out * jnp.dtype(cdt).itemsize
                        + N * HW * C_out * out_item),
    )

    out = pl.pallas_call(
        _landmark_head_kernel,
        out_shape=jax.ShapeDtypeStruct((N, HW, C_out), out_dtype),
        grid=(N, n_s),
        in_specs=[
            # channel-major activation slab; leading batch dim squeezed away
            pl.BlockSpec((None, C_in, thw), lambda n, s: (n, 0, s)),
            pl.BlockSpec((C_in, C_out), lambda n, s: (0, 0)),   # full weight
            pl.BlockSpec((1, C_out), lambda n, s: (0, 0)),      # full bias
        ],
        out_specs=pl.BlockSpec((None, thw, C_out), lambda n, s: (n, s, 0)),
        compiler_params=pltpu.CompilerParams(
            dimension_semantics=("parallel", "parallel"),
            vmem_limit_bytes=_VMEM_LIMIT_BYTES),
        cost_estimate=cost,
    )(x3, w_kn, b_2d)

    # (N, H*W, num_anchors*10) -> (N, H*W*num_anchors, 10)  (pure view, row-major)
    return out.reshape(N, HW * num_anchors, 10)


def _reference(x_nchw, weight_oi, bias_o, num_anchors=3,
               compute_dtype=jnp.bfloat16):
    # Pure-JAX reference mirroring the PyTorch forward, using the same compute
    # dtype + f32 accumulation as the kernel so results are directly comparable.
    # (bf16 compute diverges slightly from PyTorch's f32 conv; fine for inference.)
    cdt = jnp.dtype(compute_dtype) if compute_dtype is not None else jnp.dtype(x_nchw.dtype)
    N = x_nchw.shape[0]
    out = jnp.einsum("nchw,oc->nhwo",
                     x_nchw.astype(cdt), weight_oi.astype(cdt),
                     preferred_element_type=jnp.float32)
    out = out + bias_o.astype(jnp.float32)
    return out.reshape(N, -1, 10)


if __name__ == "__main__":
    key = jax.random.PRNGKey(0)
    k_x, k_w, k_b, k_x2 = jax.random.split(key, 4)

    num_anchors = 3
    C_out = num_anchors * 10
    C_in = 32   # scaled-down inchannels

    weight = jax.random.normal(k_w, (C_out, C_in), dtype=jnp.float32) * 0.05
    bias = jax.random.normal(k_b, (C_out,), dtype=jnp.float32) * 0.01

    # Test 1: small, evenly tiled shapes.
    N, H, W = 2, 16, 16
    x = jax.random.normal(k_x, (N, C_in, H, W), dtype=jnp.float32)
    out = jax.block_until_ready(
        landmark_head_forward(x, weight, bias, num_anchors=num_anchors))
    ref = _reference(x, weight, bias, num_anchors=num_anchors)
    assert out.shape == (N, H * W * num_anchors, 10), out.shape
    assert jnp.allclose(out, ref, atol=2e-3, rtol=2e-3), "mismatch vs reference (test 1)"

    # Test 2: batch-1, ragged spatial extent — exercises the pl.cdiv boundary
    # block (no jnp.pad path) and the >=2-grid-step split for dual-TC chips.
    N2, H2, W2 = 1, 10, 13
    x2 = jax.random.normal(k_x2, (N2, C_in, H2, W2), dtype=jnp.float32)
    out2 = jax.block_until_ready(
        landmark_head_forward(x2, weight, bias, num_anchors=num_anchors))
    ref2 = _reference(x2, weight, bias, num_anchors=num_anchors)
    assert out2.shape == (N2, H2 * W2 * num_anchors, 10), out2.shape
    assert jnp.allclose(out2, ref2, atol=2e-3, rtol=2e-3), "mismatch vs reference (test 2)"

    print("KERNEL_OK")
</pallas_src>

<mosaic_0001>
module attributes {stable_mosaic.version = 11 : i64} {
  func.func @_landmark_head_kernel(%arg0: i32, %arg1: i32, %arg2: memref<1x32x256xf32, #tpu.memory_space<vmem>>, %arg3: memref<32x30xbf16, #tpu.memory_space<vmem>>, %arg4: memref<1x30xf32, #tpu.memory_space<vmem>>, %arg5: memref<1x256x30xf32, #tpu.memory_space<vmem>>) attributes {dimension_semantics = [#tpu.dimension_semantics<parallel>, #tpu.dimension_semantics<parallel>], iteration_bounds = array<i64: 2, 1>, scalar_prefetch = 0 : i64, scratch_operands = 0 : i64, tpu.core_type = #tpu.core_type<tc>, window_params = [{transform_indices = @transform_0, window_bounds = array<i64: 1, 32, 256>}, {pipeline_mode = #tpu.pipeline_mode<synchronous>, transform_indices = @transform_1, window_bounds = array<i64: 32, 30>}, {pipeline_mode = #tpu.pipeline_mode<synchronous>, transform_indices = @transform_2, window_bounds = array<i64: 1, 30>}, {transform_indices = @transform_3, window_bounds = array<i64: 1, 256, 30>}]} {
    %c0 = arith.constant 0 : index
    %c0_0 = arith.constant 0 : index
    %c0_1 = arith.constant 0 : index
    %0 = vector.load %arg2[%c0, %c0_0, %c0_1] : memref<1x32x256xf32, #tpu.memory_space<vmem>>, vector<1x32x256xf32>
    %1 = vector.shape_cast %0 : vector<1x32x256xf32> to vector<32x256xf32>
    %2 = arith.truncf %1 : vector<32x256xf32> to vector<32x256xbf16>
    %c0_2 = arith.constant 0 : index
    %c0_3 = arith.constant 0 : index
    %3 = vector.load %arg3[%c0_2, %c0_3] : memref<32x30xbf16, #tpu.memory_space<vmem>>, vector<32x30xbf16>
    %cst = arith.constant dense<0.000000e+00> : vector<256x30xf32>
    %4 = tpu.matmul %2, %3, %cst {dimension_numbers = #tpu.dot_dimension_numbers<[0], [0], [1], [1], [0, 1, 1, 1], [], []>} : vector<32x256xbf16>, vector<32x30xbf16>, vector<256x30xf32> -> vector<256x30xf32>
    %c0_4 = arith.constant 0 : index
    %c0_5 = arith.constant 0 : index
    %5 = vector.load %arg4[%c0_4, %c0_5] : memref<1x30xf32, #tpu.memory_space<vmem>>, vector<1x30xf32>
    %6 = vector.broadcast %5 : vector<1x30xf32> to vector<256x30xf32>
    %7 = arith.addf %4, %6 : vector<256x30xf32>
    %c0_6 = arith.constant 0 : index
    %c0_7 = arith.constant 0 : index
    %c0_8 = arith.constant 0 : index
    %8 = vector.load %arg5[%c0_6, %c0_7, %c0_8] : memref<1x256x30xf32, #tpu.memory_space<vmem>>, vector<1x256x30xf32>
    %9 = vector.shape_cast %8 : vector<1x256x30xf32> to vector<256x30xf32>
    %10 = vector.shape_cast %7 : vector<256x30xf32> to vector<1x256x30xf32>
    tpu.vector_store %arg5[%c0_6, %c0_7, %c0_8], %10 {strides = array<i32>} : memref<1x256x30xf32, #tpu.memory_space<vmem>>, vector<1x256x30xf32>,
    return
  }
  func.func @transform_0(%arg0: i32, %arg1: i32) -> (i32, i32, i32) {
    %c0_i32 = arith.constant 0 : i32
    %c0_i32_0 = arith.constant 0 : i32
    return %arg0, %c0_i32, %arg1 : i32, i32, i32
  }
  func.func @transform_1(%arg0: i32, %arg1: i32) -> (i32, i32) {
    %c0_i32 = arith.constant 0 : i32
    %c0_i32_0 = arith.constant 0 : i32
    %c0_i32_1 = arith.constant 0 : i32
    return %c0_i32, %c0_i32_0 : i32, i32
  }
  func.func @transform_2(%arg0: i32, %arg1: i32) -> (i32, i32) {
    %c0_i32 = arith.constant 0 : i32
    %c0_i32_0 = arith.constant 0 : i32
    %c0_i32_1 = arith.constant 0 : i32
    return %c0_i32, %c0_i32_0 : i32, i32
  }
  func.func @transform_3(%arg0: i32, %arg1: i32) -> (i32, i32, i32) {
    %c0_i32 = arith.constant 0 : i32
    %c0_i32_0 = arith.constant 0 : i32
    return %arg0, %arg1, %c0_i32 : i32, i32, i32
  }
}

</mosaic_0001>

<llo_original>
// kernel: tpu_custom_call.1
$region0: #{tpu_custom_call.1}
  #allocation0 [shape = 'u32[]', space=smem, size = 0x4, offset = 0x4, fixed_abs, tag = 'smem constant byte address 0x4 - core index']
  #allocation1 [shape = 'u32[144,128]{1,0:T(1,128)}', space=vmem, size = 0x12000, scoped, tag = 'internal scratch']
  %s0 = inlined_call_operand.hbm [shape: f32[2,32,256], index: 0, kind: input, shape index: {}]
  %s1 = inlined_call_operand.hbm [shape: bf16[32,30], index: 1, kind: input, shape index: {}]
  %s2 = inlined_call_operand.vmem [shape: f32[1,30], index: 2, kind: input, shape index: {}]
  %s3 = inlined_call_operand.vmem [shape: f32[2,256,30], index: 3, kind: output, shape index: {}]
  %s4 = sld [smem:[#allocation0]]
  $region53: #{tpu_custom_call.1} parent=0
    _
  %s6 = ssub.s32 1, %s4
  %s7 = scalar_select 0, %s6, %s4
  $region1: #{tpu_custom_call.1} parent=0
    #allocation2 [shape = 'u8[65536]{0}', space=vmem, size = 0x10000, scoped, tag = 'input window, operand 0']
    #allocation3 [shape = 's32[2]{0}', space=sflag, size = 0x8, scoped, tag = 'scoped memory for tpu_custom_call.1']
    #allocation4 [shape = 'u8[8192]{0}', space=vmem, size = 0x2000, scoped, tag = 'input window, operand 1, single buffered']
    #allocation5 [shape = 's32[1]{0}', space=sflag, size = 0x4, scoped, tag = 'scoped memory for tpu_custom_call.1']
    %8 = vsyncpa [#allocation3], 0
    %s9 = scalar_lea.sflag [#allocation3], 1
    %10 = vsyncpa %s9, 0
    %11 = vsyncpa [#allocation5], 0
    loop: start=0, step=1, limit=4
    $region2: #{tpu_custom_call.1} parent=1 // loop_pre_header
      _
    $region3: #{tpu_custom_call.1} parent=1 // loop_header
      %s13 = sphi 0, %s17
      %p14 = scmp.ge.s32.totalorder %s13, 4
      %s20 = sphi 0, %s32
      %s21 = sphi 0, %s28
      %s22 = sphi 0, %s20
      %s23 = sphi 0, %s21
      %s24 = sphi 0, %s22
      %s25 = sphi 0, %s23
      %s37 = sphi 0, %s39
      %s40 = sphi 0, %s37
      %s41 = sphi 0, %s40
      %s57 = sphi 0, %s41
      %s61 = sphi 0, %s61
      %s63 = sphi 0, %s61
      %s64 = sphi 0, %s63
      %s78 = sphi 0, %s64
      %s82 = sphi 0, %s82
      %s84 = sphi 0, %s82
      %s85 = sphi 0, %s84
      %s99 = sphi 0, %s85
      %s107 = sphi 0, %s109
      %s110 = sphi 0, %s107
      %s111 = sphi 0, %s110
      %s127 = sphi 0, %s111
    $region4: #{tpu_custom_call.1} parent=1 // loop_header_branch
      %16 = sbr.rel (%p14) target = $region8
    $region5: #{tpu_custom_call.1} parent=1 // loop_body
      %s18 = ssub.s32 %s13, 1
      %s19 = ssub.s32 %s13, 2
      %s26 = sadd.s32 1, %s21
      %p27 = scmp.ge.s32.totalorder %s26, 1
      %s28 = scalar_select %p27, 0, %s26
      %s29 = sadd.s32 1, %s20
      %s30 = scalar_select %p27, %s29, %s20
      %p31 = scmp.ge.s32.totalorder %s30, 2
      %s32 = scalar_select %p31, 0, %s30
      %s33 = ssub.s32 %s20, %s32
      %s34 = ssub.s32 %s21, %s28
      %s35 = sor.u32 %s33, %s34
      %p36 = scmp.eq.s32.totalorder %s35, 0
      %s38 = sadd.s32 %s37, 1
      %s39 = scalar_select %p36, %s37, %s38
      %p42 = pneg %p36
      %p43 = scmp.eq.s32.totalorder %s13, 1
      %p44 = por %p42, %p43
      %p45 = scmp.ne.s32.totalorder %s37, %s40
      %p46 = scmp.eq.s32.totalorder %s13, 0
      %p47 = por %p45, %p46
      %p48 = scmp.ne.s32.totalorder %s37, %s40
      %p49 = scmp.eq.s32.totalorder %s18, 1
      %p50 = por %p48, %p49
      %p51 = scmp.ne.s32.totalorder %s40, %s41
      %p52 = scmp.eq.s32.totalorder %s18, 0
      %p53 = por %p51, %p52
      %p54 = scmp.ne.s32.totalorder %s40, %s41
      %p55 = scmp.eq.s32.totalorder %s19, 1
      %p56 = por %p54, %p55
      %p58 = scmp.ne.s32.totalorder %s41, %s57
      %p59 = scmp.eq.s32.totalorder %s19, 0
      %p60 = por %p58, %p59
      %s62 = sadd.s32 %s61, 1
      %p65 = scmp.eq.s32.totalorder %s13, 1
      %p66 = scmp.ne.s32.totalorder %s61, %s63
      %p67 = scmp.eq.s32.totalorder %s13, 0
      %p68 = por %p66, %p67
      %p69 = scmp.ne.s32.totalorder %s61, %s63
      %p70 = scmp.eq.s32.totalorder %s18, 1
      %p71 = por %p69, %p70
      %p72 = scmp.ne.s32.totalorder %s63, %s64
      %p73 = scmp.eq.s32.totalorder %s18, 0
      %p74 = por %p72, %p73
      %p75 = scmp.ne.s32.totalorder %s63, %s64
      %p76 = scmp.eq.s32.totalorder %s19, 1
      %p77 = por %p75, %p76
      %p79 = scmp.ne.s32.totalorder %s64, %s78
      %p80 = scmp.eq.s32.totalorder %s19, 0
      %p81 = por %p79, %p80
      %s83 = sadd.s32 %s82, 1
      %p86 = scmp.eq.s32.totalorder %s13, 1
      %p87 = scmp.ne.s32.totalorder %s82, %s84
      %p88 = scmp.eq.s32.totalorder %s13, 0
      %p89 = por %p87, %p88
      %p90 = scmp.ne.s32.totalorder %s82, %s84
      %p91 = scmp.eq.s32.totalorder %s18, 1
      %p92 = por %p90, %p91
      %p93 = scmp.ne.s32.totalorder %s84, %s85
      %p94 = scmp.eq.s32.totalorder %s18, 0
      %p95 = por %p93, %p94
      %p96 = scmp.ne.s32.totalorder %s84, %s85
      %p97 = scmp.eq.s32.totalorder %s19, 1
      %p98 = por %p96, %p97
      %p100 = scmp.ne.s32.totalorder %s85, %s99
      %p101 = scmp.eq.s32.totalorder %s19, 0
      %p102 = por %p100, %p101
      %s103 = ssub.s32 %s20, %s32
      %s104 = ssub.s32 %s21, %s28
      %s105 = sor.u32 %s103, %s104
      %p106 = scmp.eq.s32.totalorder %s105, 0
      %s108 = sadd.s32 %s107, 1
      %s109 = scalar_select %p106, %s107, %s108
      %p112 = pneg %p106
      %p113 = scmp.eq.s32.totalorder %s13, 1
      %p114 = por %p112, %p113
      %p115 = scmp.ne.s32.totalorder %s107, %s110
      %p116 = scmp.eq.s32.totalorder %s13, 0
      %p117 = por %p115, %p116
      %p118 = scmp.ne.s32.totalorder %s107, %s110
      %p119 = scmp.eq.s32.totalorder %s18, 1
      %p120 = por %p118, %p119
      %p121 = scmp.ne.s32.totalorder %s110, %s111
      %p122 = scmp.eq.s32.totalorder %s18, 0
      %p123 = por %p121, %p122
      %p124 = scmp.ne.s32.totalorder %s110, %s111
      %p125 = scmp.eq.s32.totalorder %s19, 1
      %p126 = por %p124, %p125
      %p128 = scmp.ne.s32.totalorder %s111, %s127
      %p129 = scmp.eq.s32.totalorder %s19, 0
      %p130 = por %p128, %p129
      %p131 = scmp.le.s32.totalorder 1, %s13
      %p132 = scmp.lt.s32.totalorder %s13, 3
      %p133 = pnand %p131, %p132
      %p134 = pneg %p133
      // Predicated region
      $region9: #{tpu_custom_call.1} parent=5 // pred_check
        _
      $region10: #{tpu_custom_call.1} parent=5 // pred_check_branch
        %136 = sbr.rel (%p133) target = $region12
      $region11: #{tpu_custom_call.1} parent=5 // pred_region
        %s137 = ssub.s32 %s13, 1
        // Predicated region
        $region13: #{tpu_custom_call.1} parent=11 // pred_check
          %p138 = pneg %p74
        $region14: #{tpu_custom_call.1} parent=11 // pred_check_branch
          %140 = sbr.rel (%p138) target = $region16
        $region15: #{tpu_custom_call.1} parent=11 // pred_region
          %s142 = ssub.s32 256, 256
          %143 = vsyncadd [#allocation5], %s142
          %s144 = sshll.u32 [#allocation4], 4
          %s145 = int_to_ptr.vmem [resolvable:$true] %s144
          %150 = dma.hbm_to_vmem [thread:$0]  %s1, 256, %s145, [#allocation5], 64, 64, 4
        $region16: #{tpu_custom_call.1} parent=11 // pred_fallthru
          _
        // Predicated region
        $region17: #{tpu_custom_call.1} parent=11 // pred_check
          %p151 = pneg %p95
        $region18: #{tpu_custom_call.1} parent=11 // pred_check_branch
          %153 = sbr.rel (%p151) target = $region20
        $region19: #{tpu_custom_call.1} parent=11 // pred_region
          _
        $region20: #{tpu_custom_call.1} parent=11 // pred_fallthru
          _
      $region12: #{tpu_custom_call.1} parent=5 // pred_fallthru
        _
      %p154 = scmp.lt.s32.totalorder %s13, 2
      // Predicated region
      $region21: #{tpu_custom_call.1} parent=5 // pred_check
        %p155 = pneg %p154
      $region22: #{tpu_custom_call.1} parent=5 // pred_check_branch
        %157 = sbr.rel (%p155) target = $region24
      $region23: #{tpu_custom_call.1} parent=5 // pred_region
        // Predicated region
        $region25: #{tpu_custom_call.1} parent=23 // pred_check
          %p158 = pneg %p47
        $region26: #{tpu_custom_call.1} parent=23 // pred_check_branch
          %160 = sbr.rel (%p158) target = $region28
        $region27: #{tpu_custom_call.1} parent=23 // pred_region
          %s161 = sand.u32 %s37, 1
          %s162 = scalar_lea.sflag [#allocation3], %s161
          %s163 = sand.u32 %s37, 1
          %s164 = smul.addr %s163, 64
          %s165 = scalar_lea.vmem [#allocation2], %s164
          %s166 = smul.u32 2, %s21
          %s168 = ssub.s32 1024, 1024
          %169 = vsyncadd %s162, %s168
          %s170 = smul.addr %s20, 8
          %s171 = sadd.s32 %s166, %s170
          %s172 = smul.addr %s171, 128
          %s173 = scalar_lea.hbm %s0, %s172
          %s174 = sshll.u32 %s165, 4
          %s175 = int_to_ptr.vmem [resolvable:$true] %s174
          %180 = dma.hbm_to_vmem [thread:$0]  %s173, 1024, %s175, %s162, 256, 256, 16
        $region28: #{tpu_custom_call.1} parent=23 // pred_fallthru
          _
      $region24: #{tpu_custom_call.1} parent=5 // pred_fallthru
        _
      %p181 = scmp.le.s32.totalorder 1, %s13
      %p182 = scmp.lt.s32.totalorder %s13, 3
      %p183 = pnand %p181, %p182
      %p184 = pneg %p183
      // Predicated region
      $region29: #{tpu_custom_call.1} parent=5 // pred_check
        _
      $region30: #{tpu_custom_call.1} parent=5 // pred_check_branch
        %186 = sbr.rel (%p183) target = $region32
      $region31: #{tpu_custom_call.1} parent=5 // pred_region
        %s187 = ssub.s32 %s13, 1
        %s188 = sand.u32 %s40, 1
        %s189 = scalar_lea.sflag [#allocation3], %s188
        %s190 = sand.u32 %s40, 1
        %s191 = smul.addr %s190, 64
        %s192 = scalar_lea.vmem [#allocation2], %s191
        // Predicated region
        $region33: #{tpu_custom_call.1} parent=31 // pred_check
          %p193 = pneg %p53
        $region34: #{tpu_custom_call.1} parent=31 // pred_check_branch
          %195 = sbr.rel (%p193) target = $region36
        $region35: #{tpu_custom_call.1} parent=31 // pred_region
          %196 = dma.done %s189, 1024
        $region36: #{tpu_custom_call.1} parent=31 // pred_fallthru
          _
        // Predicated region
        $region37: #{tpu_custom_call.1} parent=31 // pred_check
          %p197 = pneg %p74
        $region38: #{tpu_custom_call.1} parent=31 // pred_check_branch
          %199 = sbr.rel (%p197) target = $region40
        $region39: #{tpu_custom_call.1} parent=31 // pred_region
          %200 = dma.done [#allocation5], 256
        $region40: #{tpu_custom_call.1} parent=31 // pred_fallthru
          _
        %s201 = sand.u32 %s40, 1
        %s202 = scalar_lea.sflag [#allocation3], %s201
        %s203 = sand.u32 %s40, 1
        %s204 = smul.addr %s203, 64
        %s205 = scalar_lea.vmem [#allocation2], %s204
        %p206 = pneg %p53
        %p207 = pneg %p50
        %p208 = pneg %p74
        %p209 = pneg %p71
        %p210 = pneg %p95
        %p211 = pneg %p92
        %p212 = pneg %p123
        %p213 = pneg %p120
        %s214 = smul.u32 32, %s23
        %p215 = scmp.lt.s32.totalorder %s22, 1
        %s216 = scalar_select %p215, %s22, 1
        %p217 = scmp.lt.s32.totalorder %s214, 31
        %s218 = scalar_select %p217, %s214, 31
        %s219 = smul.addr %s216, 32
        %s220 = sadd.s32 %s218, %s219
        %s221 = smul.addr %s220, 8
        %s222 = scalar_lea.vmem %s3, %s221
        %s223 = smul.u32 2, %s23
        %s224 = smul.u32 32, %s23
        %p225 = scmp.lt.s32.totalorder %s22, 1
        %s226 = scalar_select %p225, %s22, 1
        %p227 = scmp.lt.s32.totalorder %s224, 31
        %s228 = scalar_select %p227, %s224, 31
        %s229 = smul.addr %s226, 32
        %s230 = sadd.s32 %s228, %s229
        %s231 = smul.addr %s230, 8
        %s232 = scalar_lea.vmem %s3, %s231
        %s233 = smul.u32 32, %s23
        %v235 = vld [vmem:[%s192] sm:$0xff]
        %v236 = vld [vmem:[%s192 + $0x8] sm:$0xff]
        %v237 = vld [vmem:[%s192 + $0x10] sm:$0xff]
        %v238 = vld [vmem:[%s192 + $0x18] sm:$0xff]
        %v239 = vld [vmem:[%s192 + $0x20] sm:$0xff]
        %v240 = vld [vmem:[%s192 + $0x28] sm:$0xff]
        %v241 = vld [vmem:[%s192 + $0x30] sm:$0xff]
        %v242 = vld [vmem:[%s192 + $0x38] sm:$0xff]
        %v243 = vpack.c.bf16 %v237, %v235
        %v244 = vpack.c.bf16 %v238, %v236
        %v245 = vpack.c.bf16 %v241, %v239
        %v246 = vpack.c.bf16 %v242, %v240
        %v247 = vld [vmem:[#allocation4] sm:$0xf]
        %v248 = vld [vmem:[#allocation4 + $0x4] sm:$0xf]
        %v249 = vld [vmem:[#allocation4 + $0x8] sm:$0xf]
        %v250 = vld [vmem:[#allocation4 + $0xc] sm:$0xf]
        %v251 = vld [vmem:[%s2] sm:$0x1]
        %v253 = vlaneseq
        %v254 = vshrl.u32 %v253, 7
        %v255 = vsub.s32 0, %v254
        %v256 = vrot.slane %v251, %v255
        %258 = vxpose.xlu0.c.b16.start [1/8] %v243, 128
        %259 = vxpose.xlu0.c.b16.cont [2/8] %v245, 128
        %260 = vxpose.xlu0.c.b16.cont [3/8] 0, 128
        %261 = vxpose.xlu0.c.b16.cont [4/8] 0, 128
        %262 = vxpose.xlu0.c.b16.cont [5/8] 0, 128
        %263 = vxpose.xlu0.c.b16.cont [6/8] 0, 128
        %264 = vxpose.xlu0.c.b16.cont [7/8] 0, 128
        %265 = vxpose.xlu0.c.b16.end [8/8] 0, 128
        %v266 = vpop.trf.xlu0
        %v267 = vpop.trf.xlu0
        %v268 = vpop.trf.xlu0
        %v269 = vpop.trf.xlu0
        %v270 = vpop.trf.xlu0
        %v271 = vpop.trf.xlu0
        %v272 = vpop.trf.xlu0
        %v273 = vpop.trf.xlu0
        %274 = vxpose.xlu0.c.b16.start [1/8] %v244, 128
        %275 = vxpose.xlu0.c.b16.cont [2/8] %v246, 128
        %276 = vxpose.xlu0.c.b16.cont [3/8] 0, 128
        %277 = vxpose.xlu0.c.b16.cont [4/8] 0, 128
        %278 = vxpose.xlu0.c.b16.cont [5/8] 0, 128
        %279 = vxpose.xlu0.c.b16.cont [6/8] 0, 128
        %280 = vxpose.xlu0.c.b16.cont [7/8] 0, 128
        %281 = vxpose.xlu0.c.b16.end [8/8] 0, 128
        %v282 = vpop.trf.xlu0
        %v283 = vpop.trf.xlu0
        %v284 = vpop.trf.xlu0
        %v285 = vpop.trf.xlu0
        %v286 = vpop.trf.xlu0
        %v287 = vpop.trf.xlu0
        %v288 = vpop.trf.xlu0
        %v289 = vpop.trf.xlu0
        %v294 = vunpack.c.l.b16 %v247
        %v295 = vunpack.c.l.b16 %v248
        %v296 = vunpack.c.l.b16 %v249
        %v297 = vunpack.c.l.b16 %v250
        %v298 = vpack.c.b16 %v295, %v294
        %v299 = vpack.c.b16 %v297, %v296
        %vm302 = vcmask 261120
        %v304 = vsel %vm302, %v266, 0
        %v307 = vsel %vm302, %v267, 0
        %v310 = vsel %vm302, %v268, 0
        %v313 = vsel %vm302, %v269, 0
        %v316 = vsel %vm302, %v270, 0
        %v319 = vsel %vm302, %v271, 0
        %v322 = vsel %vm302, %v272, 0
        %v325 = vsel %vm302, %v273, 0
        %v328 = vsel %vm302, %v282, 0
        %v331 = vsel %vm302, %v283, 0
        %v334 = vsel %vm302, %v284, 0
        %v337 = vsel %vm302, %v285, 0
        %v340 = vsel %vm302, %v286, 0
        %v343 = vsel %vm302, %v287, 0
        %v346 = vsel %vm302, %v288, 0
        %v349 = vsel %vm302, %v289, 0
        %351 = vmatprep.subr.bf16.mxu0 0
        %352 = vmatpush1.bf16.msra.mxu0 0
        %353 = vmatprep.subr.bf16.mxu0 0
        %354 = vmatpush1.bf16.msra.mxu0 0
        %355 = vmatprep.subr.bf16.mxu0 0
        %356 = vmatpush1.bf16.msra.mxu0 0
        %357 = vmatprep.subr.bf16.mxu0 0
        %358 = vmatpush1.bf16.msra.mxu0 0
        %359 = vmatprep.subr.bf16.mxu0 0
        %360 = vmatpush1.bf16.msra.mxu0 0
        %361 = vmatprep.subr.bf16.mxu0 0
        %362 = vmatpush1.bf16.msra.mxu0 0
        %363 = vmatprep.subr.bf16.mxu0 0
        %364 = vmatpush1.bf16.msra.mxu0 %v299
        %365 = vmatprep.subr.bf16.mxu0 0
        %366 = vmatpush1.bf16.msra.mxu0 %v298
        %367 = vmatprep.subr.bf16.mxu0 0
        %368 = vmatpush2.bf16.msra.mxu0 0
        %369 = vmatprep.subr.bf16.mxu0 0
        %370 = vmatpush2.bf16.msra.mxu0 0
        %371 = vmatprep.subr.bf16.mxu0 0
        %372 = vmatpush2.bf16.msra.mxu0 0
        %373 = vmatprep.subr.bf16.mxu0 0
        %374 = vmatpush2.bf16.msra.mxu0 0
        %375 = vmatprep.subr.bf16.mxu0 0
        %376 = vmatpush2.bf16.msra.mxu0 0
        %377 = vmatprep.subr.bf16.mxu0 0
        %378 = vmatpush2.bf16.msra.mxu0 0
        %379 = vmatprep.subr.bf16.mxu0 0
        %380 = vmatpush2.bf16.msra.mxu0 0
        %381 = vmatprep.subr.bf16.mxu0 0
        %382 = vmatpush2.bf16.msra.mxu0 0
        %383 = vmatprep.mubr.bf16.mxu0 0
        %384 = vmatmul.mubr.bf16.gmra.mxu0 %v304
        %v385 = vpop.f32.mrf.mxu0
        %v386 = vadd.f32 %v256, %v385
        %v387 = vpop.f32.mrf.mxu0
        %v388 = vpop.f32.mrf.mxu0
        %v389 = vadd.f32 %v256, %v388
        %v390 = vpop.f32.mrf.mxu0
        %391 = vmatprep.mubr.bf16.mxu0 0
        %392 = vmatmul.mubr.bf16.gmra.mxu0 %v307
        %v393 = vpop.f32.mrf.mxu0
        %v394 = vadd.f32 %v256, %v393
        %v395 = vpop.f32.mrf.mxu0
        %v396 = vpop.f32.mrf.mxu0
        %v397 = vadd.f32 %v256, %v396
        %v398 = vpop.f32.mrf.mxu0
        %399 = vmatprep.mubr.bf16.mxu0 0
        %400 = vmatmul.mubr.bf16.gmra.mxu0 %v310
        %v401 = vpop.f32.mrf.mxu0
        %v402 = vadd.f32 %v256, %v401
        %v403 = vpop.f32.mrf.mxu0
        %v404 = vpop.f32.mrf.mxu0
        %v405 = vadd.f32 %v256, %v404
        %v406 = vpop.f32.mrf.mxu0
        %407 = vmatprep.mubr.bf16.mxu0 0
        %408 = vmatmul.mubr.bf16.gmra.mxu0 %v313
        %v409 = vpop.f32.mrf.mxu0
        %v410 = vadd.f32 %v256, %v409
        %v411 = vpop.f32.mrf.mxu0
        %v412 = vpop.f32.mrf.mxu0
        %v413 = vadd.f32 %v256, %v412
        %v414 = vpop.f32.mrf.mxu0
        %415 = vmatprep.mubr.bf16.mxu0 0
        %416 = vmatmul.mubr.bf16.gmra.mxu0 %v316
        %v417 = vpop.f32.mrf.mxu0
        %v418 = vadd.f32 %v256, %v417
        %v419 = vpop.f32.mrf.mxu0
        %v420 = vpop.f32.mrf.mxu0
        %v421 = vadd.f32 %v256, %v420
        %v422 = vpop.f32.mrf.mxu0
        %423 = vmatprep.mubr.bf16.mxu0 0
        %424 = vmatmul.mubr.bf16.gmra.mxu0 %v319
        %v425 = vpop.f32.mrf.mxu0
        %v426 = vadd.f32 %v256, %v425
        %v427 = vpop.f32.mrf.mxu0
        %v428 = vpop.f32.mrf.mxu0
        %v429 = vadd.f32 %v256, %v428
        %v430 = vpop.f32.mrf.mxu0
        %431 = vmatprep.mubr.bf16.mxu0 0
        %432 = vmatmul.mubr.bf16.gmra.mxu0 %v322
        %v433 = vpop.f32.mrf.mxu0
        %v434 = vadd.f32 %v256, %v433
        %v435 = vpop.f32.mrf.mxu0
        %v436 = vpop.f32.mrf.mxu0
        %v437 = vadd.f32 %v256, %v436
        %v438 = vpop.f32.mrf.mxu0
        %439 = vmatprep.mubr.bf16.mxu0 0
        %440 = vmatmul.mubr.bf16.gmra.mxu0 %v325
        %v441 = vpop.f32.mrf.mxu0
        %v442 = vadd.f32 %v256, %v441
        %v443 = vpop.f32.mrf.mxu0
        %v444 = vpop.f32.mrf.mxu0
        %v445 = vadd.f32 %v256, %v444
        %v446 = vpop.f32.mrf.mxu0
        %447 = vmatprep.mubr.bf16.mxu0 0
        %448 = vmatmul.mubr.bf16.gmra.mxu0 %v328
        %v449 = vpop.f32.mrf.mxu0
        %v450 = vadd.f32 %v256, %v449
        %v451 = vpop.f32.mrf.mxu0
        %v452 = vpop.f32.mrf.mxu0
        %v453 = vadd.f32 %v256, %v452
        %v454 = vpop.f32.mrf.mxu0
        %455 = vmatprep.mubr.bf16.mxu0 0
        %456 = vmatmul.mubr.bf16.gmra.mxu0 %v331
        %v457 = vpop.f32.mrf.mxu0
        %v458 = vadd.f32 %v256, %v457
        %v459 = vpop.f32.mrf.mxu0
        %v460 = vpop.f32.mrf.mxu0
        %v461 = vadd.f32 %v256, %v460
        %v462 = vpop.f32.mrf.mxu0
        %463 = vmatprep.mubr.bf16.mxu0 0
        %464 = vmatmul.mubr.bf16.gmra.mxu0 %v334
        %v465 = vpop.f32.mrf.mxu0
        %v466 = vadd.f32 %v256, %v465
        %v467 = vpop.f32.mrf.mxu0
        %v468 = vpop.f32.mrf.mxu0
        %v469 = vadd.f32 %v256, %v468
        %v470 = vpop.f32.mrf.mxu0
        %471 = vmatprep.mubr.bf16.mxu0 0
        %472 = vmatmul.mubr.bf16.gmra.mxu0 %v337
        %v473 = vpop.f32.mrf.mxu0
        %v474 = vadd.f32 %v256, %v473
        %v475 = vpop.f32.mrf.mxu0
        %v476 = vpop.f32.mrf.mxu0
        %v477 = vadd.f32 %v256, %v476
        %v478 = vpop.f32.mrf.mxu0
        %479 = vmatprep.mubr.bf16.mxu0 0
        %480 = vmatmul.mubr.bf16.gmra.mxu0 %v340
        %v481 = vpop.f32.mrf.mxu0
        %v482 = vadd.f32 %v256, %v481
        %v483 = vpop.f32.mrf.mxu0
        %v484 = vpop.f32.mrf.mxu0
        %v485 = vadd.f32 %v256, %v484
        %v486 = vpop.f32.mrf.mxu0
        %487 = vmatprep.mubr.bf16.mxu0 0
        %488 = vmatmul.mubr.bf16.gmra.mxu0 %v343
        %v489 = vpop.f32.mrf.mxu0
        %v490 = vadd.f32 %v256, %v489
        %v491 = vpop.f32.mrf.mxu0
        %v492 = vpop.f32.mrf.mxu0
        %v493 = vadd.f32 %v256, %v492
        %v494 = vpop.f32.mrf.mxu0
        %495 = vmatprep.mubr.bf16.mxu0 0
        %496 = vmatmul.mubr.bf16.gmra.mxu0 %v346
        %v497 = vpop.f32.mrf.mxu0
        %v498 = vadd.f32 %v256, %v497
        %v499 = vpop.f32.mrf.mxu0
        %v500 = vpop.f32.mrf.mxu0
        %v501 = vadd.f32 %v256, %v500
        %v502 = vpop.f32.mrf.mxu0
        %503 = vmatprep.mubr.bf16.mxu0 0
        %504 = vmatmul.mubr.bf16.gmra.mxu0 %v349
        %v505 = vpop.f32.mrf.mxu0
        %v506 = vadd.f32 %v256, %v505
        %v507 = vpop.f32.mrf.mxu0
        %v508 = vpop.f32.mrf.mxu0
        %v509 = vadd.f32 %v256, %v508
        %v510 = vpop.f32.mrf.mxu0
        %511 = vdwg.mxu0
        %vm512 = vcmask 244736
        %513 = vst.msk [vmem:[%s232] sm:$0xff] %vm512, %v386
        %514 = vst.msk [vmem:[%s232 + $0x8] sm:$0xff] %vm512, %v389
        %515 = vst.msk [vmem:[%s232 + $0x10] sm:$0xff] %vm512, %v394
        %516 = vst.msk [vmem:[%s232 + $0x18] sm:$0xff] %vm512, %v397
        %517 = vst.msk [vmem:[%s232 + $0x20] sm:$0xff] %vm512, %v402
        %518 = vst.msk [vmem:[%s232 + $0x28] sm:$0xff] %vm512, %v405
        %519 = vst.msk [vmem:[%s232 + $0x30] sm:$0xff] %vm512, %v410
        %520 = vst.msk [vmem:[%s232 + $0x38] sm:$0xff] %vm512, %v413
        %521 = vst.msk [vmem:[%s232 + $0x40] sm:$0xff] %vm512, %v418
        %522 = vst.msk [vmem:[%s232 + $0x48] sm:$0xff] %vm512, %v421
        %523 = vst.msk [vmem:[%s232 + $0x50] sm:$0xff] %vm512, %v426
        %524 = vst.msk [vmem:[%s232 + $0x58] sm:$0xff] %vm512, %v429
        %525 = vst.msk [vmem:[%s232 + $0x60] sm:$0xff] %vm512, %v434
        %526 = vst.msk [vmem:[%s232 + $0x68] sm:$0xff] %vm512, %v437
        %527 = vst.msk [vmem:[%s232 + $0x70] sm:$0xff] %vm512, %v442
        %528 = vst.msk [vmem:[%s232 + $0x78] sm:$0xff] %vm512, %v445
        %529 = vst.msk [vmem:[%s232 + $0x80] sm:$0xff] %vm512, %v450
        %530 = vst.msk [vmem:[%s232 + $0x88] sm:$0xff] %vm512, %v453
        %531 = vst.msk [vmem:[%s232 + $0x90] sm:$0xff] %vm512, %v458
        %532 = vst.msk [vmem:[%s232 + $0x98] sm:$0xff] %vm512, %v461
        %533 = vst.msk [vmem:[%s232 + $0xa0] sm:$0xff] %vm512, %v466
        %534 = vst.msk [vmem:[%s232 + $0xa8] sm:$0xff] %vm512, %v469
        %535 = vst.msk [vmem:[%s232 + $0xb0] sm:$0xff] %vm512, %v474
        %536 = vst.msk [vmem:[%s232 + $0xb8] sm:$0xff] %vm512, %v477
        %537 = vst.msk [vmem:[%s232 + $0xc0] sm:$0xff] %vm512, %v482
        %538 = vst.msk [vmem:[%s232 + $0xc8] sm:$0xff] %vm512, %v485
        %539 = vst.msk [vmem:[%s232 + $0xd0] sm:$0xff] %vm512, %v490
        %540 = vst.msk [vmem:[%s232 + $0xd8] sm:$0xff] %vm512, %v493
        %541 = vst.msk [vmem:[%s232 + $0xe0] sm:$0xff] %vm512, %v498
        %542 = vst.msk [vmem:[%s232 + $0xe8] sm:$0xff] %vm512, %v501
        %543 = vst.msk [vmem:[%s232 + $0xf0] sm:$0xff] %vm512, %v506
        %544 = vst.msk [vmem:[%s232 + $0xf8] sm:$0xff] %vm512, %v509
        %s545 = smul.u32 32, %s23
        %p546 = scmp.lt.s32.totalorder %s22, 1
        %s547 = scalar_select %p546, %s22, 1
        %p548 = scmp.lt.s32.totalorder %s545, 31
        %s549 = scalar_select %p548, %s545, 31
        %s550 = smul.addr %s547, 32
        %s551 = sadd.s32 %s549, %s550
        %s552 = smul.addr %s551, 8
        %s553 = scalar_lea.vmem %s3, %s552
        // Predicated region
        $region41: #{tpu_custom_call.1} parent=31 // pred_check
          %p554 = pneg %p120
        $region42: #{tpu_custom_call.1} parent=31 // pred_check_branch
          %556 = sbr.rel (%p554) target = $region44
        $region43: #{tpu_custom_call.1} parent=31 // pred_region
          %s557 = smul.u32 32, %s23
        $region44: #{tpu_custom_call.1} parent=31 // pred_fallthru
          _
      $region32: #{tpu_custom_call.1} parent=5 // pred_fallthru
        _
      %p558 = scmp.le.s32.totalorder 2, %s13
      // Predicated region
      $region45: #{tpu_custom_call.1} parent=5 // pred_check
        %p559 = pneg %p558
      $region46: #{tpu_custom_call.1} parent=5 // pred_check_branch
        %561 = sbr.rel (%p559) target = $region48
      $region47: #{tpu_custom_call.1} parent=5 // pred_region
        %s562 = ssub.s32 %s13, 2
        // Predicated region
        $region49: #{tpu_custom_call.1} parent=47 // pred_check
          %p563 = pneg %p126
        $region50: #{tpu_custom_call.1} parent=47 // pred_check_branch
          %565 = sbr.rel (%p563) target = $region52
        $region51: #{tpu_custom_call.1} parent=47 // pred_region
          %s566 = smul.u32 32, %s25
          %p567 = scmp.lt.s32.totalorder %s24, 1
          %s568 = scalar_select %p567, %s24, 1
          %p569 = scmp.lt.s32.totalorder %s566, 31
          %s570 = scalar_select %p569, %s566, 31
          %s571 = smul.addr %s568, 32
          %s572 = sadd.s32 %s570, %s571
          %s573 = smul.addr %s572, 8
          %s574 = scalar_lea.vmem %s3, %s573
        $region52: #{tpu_custom_call.1} parent=47 // pred_fallthru
          _
      $region48: #{tpu_custom_call.1} parent=5 // pred_fallthru
        _
    $region6: #{tpu_custom_call.1} parent=1 // loop_footer
      %s17 = sadd.s32 1, %s13
    $region7: #{tpu_custom_call.1} parent=1 // loop_footer_branch
      %12 = sbr.rel target = $region3
    $region8: #{tpu_custom_call.1} parent=1 // loop_exit
      _
    %575 = vsyncpa [#allocation3], 1
    %s576 = scalar_lea.sflag [#allocation3], 1
    %577 = vsyncpa %s576, 1
    %578 = vsyncpa [#allocation5], 1

</llo_original>
